<compile_context>
chip_gen: v5e
topology: v5e:2x2
jax: 0.10.0
libtpu: 0.0.40
codegen_flags: <defaults>
</compile_context>

<pallas_src>
import jax
import jax.numpy as jnp
from jax import lax
from jax.experimental import pallas as pl
from jax.experimental.pallas import tpu as pltpu


# ---------------------------------------------------------------------------
# Kernel
# ---------------------------------------------------------------------------
def _block_kernel(x_ref, wb1_ref, b1_ref, wb2_ref, b2_ref, out_ref):
  """Fused conv1+bn1+relu -> conv2+bn2 -> +identity -> relu (lane-dense).

  x_ref   : (BN, H, W*C) f32    input block
  wb1_ref : (3, W*C, W*C) bf16  row-band conv1 weights (BN1 scale folded in)
  b1_ref  : (1, W*C) f32        folded BN1 bias (tiled over W)
  wb2_ref : (3, W*C, W*C) bf16  row-band conv2 weights (BN2 scale folded in)
  b2_ref  : (1, W*C) f32        folded BN2 bias (tiled over W)
  out_ref : (BN, H, W*C) f32    output block
  """
  BN, H, WC = x_ref.shape

  def conv3x3_bn(src, wb_ref, b_ref):
    # out[h] = src[h-1] @ B0 + src[h] @ B1 + src[h+1] @ B2 + bias
    # (W-padding lives inside the band matrices; H-padding = zero boundary
    #  rows, realized as register-level row shifts below.)
    flat = src.reshape(BN * H, WC).astype(jnp.bfloat16)   # layout-free if H%8==0
    y0 = jnp.dot(flat, wb_ref[0], preferred_element_type=jnp.float32)
    y1 = jnp.dot(flat, wb_ref[1], preferred_element_type=jnp.float32)
    y2 = jnp.dot(flat, wb_ref[2], preferred_element_type=jnp.float32)
    y0 = y0.reshape(BN, H, WC)
    y1 = y1.reshape(BN, H, WC)
    y2 = y2.reshape(BN, H, WC)
    zrow = jnp.zeros((BN, 1, WC), jnp.float32)
    out = (jnp.concatenate([zrow, y0[:, :H - 1, :]], axis=1)   # src[h-1] @ B0
           + y1                                                # src[h]   @ B1
           + jnp.concatenate([y2[:, 1:, :], zrow], axis=1))    # src[h+1] @ B2
    return out + b_ref[...]

  mid = jnp.maximum(conv3x3_bn(x_ref[...], wb1_ref, b1_ref), 0.0)
  out = conv3x3_bn(mid, wb2_ref, b2_ref)
  # Residual re-read from VMEM here (not held live across the matmuls).
  out_ref[...] = jnp.maximum(out + x_ref[...], 0.0)


# ---------------------------------------------------------------------------
# VMEM accounting / block-size selection (tile-padded, generation-aware)
# ---------------------------------------------------------------------------
def _ceil_to(x, m):
  return -(-x // m) * m


def _padded_bytes(shape, itemsize):
  """Bytes after Mosaic (8, 128) tile padding of the last two dims."""
  if len(shape) == 0:
    return itemsize
  if len(shape) == 1:
    return 8 * _ceil_to(shape[0], 128) * itemsize
  lead = 1
  for d in shape[:-2]:
    lead *= d
  return lead * _ceil_to(shape[-2], 8) * _ceil_to(shape[-1], 128) * itemsize


def _per_step_vmem_bytes(bn, H, WC):
  blk = _padded_bytes((bn, H, WC), 4)
  io = 2 * (2 * blk)                                # x + out blocks, 2x buffered
  wts = 2 * 2 * _padded_bytes((3, WC, WC), 2)       # wb1 + wb2 (bf16), 2x buffered
  bias = 2 * 2 * _padded_bytes((1, WC), 4)
  temps = 8 * blk                                   # in-kernel live values
  return io + wts + bias + temps


def _tpu_vmem_info():
  """Returns (vmem_capacity_bytes, assume_two_tensorcores)."""
  vmem = None
  try:
    info = pltpu.get_tpu_info()
    vmem = int(getattr(info, "vmem_capacity_bytes", 0)) or None
  except Exception:
    vmem = None
  if vmem is None:
    vmem = 64 * 1024 * 1024          # conservative (v7x-sized) fallback
  # v7x: 64 MiB VMEM per TC, 2 TCs/chip.  v5e/v6e: 128 MiB, 1 TC.
  two_tc = vmem <= 64 * 1024 * 1024
  return vmem, two_tc


def _vmem_limit_for(step_bytes, vmem_cap):
  return int(min(vmem_cap - (4 << 20), max(32 << 20, step_bytes + (8 << 20))))


def _choose_batch_block(N, H, WC):
  vmem, two_tc = _tpu_vmem_info()
  # Per-step budget with headroom for compiler scratch & pipelining.
  budget = min(int(vmem * 0.35), (22 << 20) if two_tc else (56 << 20))
  divisors = [d for d in range(1, N + 1) if N % d == 0]
  feasible = [d for d in divisors if _per_step_vmem_bytes(d, H, WC) <= budget]
  if not feasible:
    bn = 1
  elif two_tc:
    # 2 TensorCores: prefer an even number of >=2 "parallel" grid steps so the
    # batch axis splits evenly across both cores, then maximize the block.
    even = [d for d in feasible if N // d >= 2 and (N // d) % 2 == 0]
    multi = [d for d in feasible if N // d >= 2]
    bn = max(even) if even else (max(multi) if multi else max(feasible))
  else:
    # 1 TensorCore (v5e/v6e): fewest, largest steps; a grid of 1 is fine.
    bn = max(feasible)
  return bn, _vmem_limit_for(_per_step_vmem_bytes(bn, H, WC), vmem)


# ---------------------------------------------------------------------------
# Weight preparation (BN folding + row-band matrices), wrapper
# ---------------------------------------------------------------------------
def _fold_bn(w_oihw, bn, eps):
  # BN eval mode: bn(y) = y*s + b, folded into the conv's Cout axis.
  s = bn["gamma"] * lax.rsqrt(bn["var"] + eps)                  # (Cout,)
  b = bn["beta"] - bn["mean"] * s                               # (Cout,)
  w_hwio = jnp.transpose(w_oihw * s[:, None, None, None], (2, 3, 1, 0))
  return w_hwio.astype(jnp.float32), b.astype(jnp.float32)      # (3,3,Ci,Co),(Co,)


def _band_weights(w_hwio, W):
  """(3,3,Cin,Cout) conv weights -> (3, W*Cin, W*Cout) row-band matrices.

  B[dy][wi*Cin+ci, wo*Cout+co] = w[dy, wi-wo+1, ci, co] if 0<=wi-wo+1<=2 else 0,
  so that for each output row h:  out[h] = sum_dy in_row[h+dy-1] @ B[dy]
  (width zero-padding is encoded by the band; height padding handled in-kernel).
  """
  _, _, Cin, Cout = w_hwio.shape
  wi = jnp.arange(W)[:, None]
  wo = jnp.arange(W)[None, :]
  dx = wi - wo + 1                                   # (W, W)
  valid = (dx >= 0) & (dx <= 2)
  dx_c = jnp.clip(dx, 0, 2)
  bands = []
  for dy in range(3):
    taps = w_hwio[dy][dx_c]                          # (W, W, Cin, Cout)
    taps = jnp.where(valid[:, :, None, None], taps, 0.0)
    bands.append(jnp.transpose(taps, (0, 2, 1, 3)).reshape(W * Cin, W * Cout))
  return jnp.stack(bands, axis=0)                    # (3, W*Cin, W*Cout)


def basic_block_res(x_nchw, w1, bn1, w2, bn2, eps=1e-5, batch_block=None):
  """x_nchw: (N, C, H, W) f32. w*: (Cout, Cin, 3, 3). bn*: dict of (C,) arrays."""
  N, C, H, W = x_nchw.shape
  cout1, cin1, kh1, kw1 = w1.shape
  cout2, cin2, kh2, kw2 = w2.shape
  assert (kh1, kw1, kh2, kw2) == (3, 3, 3, 3)
  # TODO(synk): option-'A' strided / zero-padded shortcut (stride != 1 or
  #             in_planes != planes) is not implemented; identity-shortcut only.
  assert cin1 == C and cout1 == cin2 == cout2 == C, (
      "only stride=1 with in_planes == planes (identity shortcut) is supported")

  WC = W * C

  w1_hwio, b1 = _fold_bn(w1, bn1, eps)
  w2_hwio, b2 = _fold_bn(w2, bn2, eps)
  wb1 = _band_weights(w1_hwio, W).astype(jnp.bfloat16)       # (3, WC, WC)
  wb2 = _band_weights(w2_hwio, W).astype(jnp.bfloat16)
  b1_row = jnp.tile(b1, W).reshape(1, WC)                    # f32
  b2_row = jnp.tile(b2, W).reshape(1, WC)

  # NCHW -> NHWC -> lane-dense (N, H, W*C).
  x_lane = jnp.transpose(x_nchw, (0, 2, 3, 1)).reshape(N, H, WC).astype(jnp.float32)

  if batch_block is None:
    bn_blk, vmem_limit = _choose_batch_block(N, H, WC)
  else:
    bn_blk = batch_block
    vmem_limit = _vmem_limit_for(_per_step_vmem_bytes(bn_blk, H, WC),
                                 _tpu_vmem_info()[0])
  assert N % bn_blk == 0
  grid = (N // bn_blk,)

  out_lane = pl.pallas_call(
      _block_kernel,
      out_shape=jax.ShapeDtypeStruct((N, H, WC), jnp.float32),
      grid=grid,
      in_specs=[
          pl.BlockSpec((bn_blk, H, WC), lambda n: (n, 0, 0)),
          pl.BlockSpec((3, WC, WC), lambda n: (0, 0, 0)),
          pl.BlockSpec((1, WC), lambda n: (0, 0)),
          pl.BlockSpec((3, WC, WC), lambda n: (0, 0, 0)),
          pl.BlockSpec((1, WC), lambda n: (0, 0)),
      ],
      out_specs=pl.BlockSpec((bn_blk, H, WC), lambda n: (n, 0, 0)),
      compiler_params=pltpu.CompilerParams(
          dimension_semantics=("parallel",),
          vmem_limit_bytes=vmem_limit),
  )(x_lane, wb1, b1_row, wb2, b2_row)

  return jnp.transpose(out_lane.reshape(N, H, W, C), (0, 3, 1, 2))  # back to NCHW


# ---------------------------------------------------------------------------
# Pure-JAX reference + test
# ---------------------------------------------------------------------------
def _reference(x_nchw, w1, bn1, w2, bn2, eps=1e-5):
  """NCHW reference mirroring the PyTorch forward (eval-mode BN)."""
  def conv(x, w):
    return lax.conv_general_dilated(
        x, w, window_strides=(1, 1), padding=((1, 1), (1, 1)),
        dimension_numbers=("NCHW", "OIHW", "NCHW"))

  def bn(x, p):
    s = p["gamma"] * lax.rsqrt(p["var"] + eps)
    b = p["beta"] - p["mean"] * s
    return x * s[None, :, None, None] + b[None, :, None, None]

  out = jax.nn.relu(bn(conv(x_nchw, w1), bn1))
  out = bn(conv(out, w2), bn2)
  out = out + x_nchw  # identity shortcut (stride=1, in_planes == planes)
  return jax.nn.relu(out)


if __name__ == "__main__":
  key = jax.random.PRNGKey(0)
  N, C, H, W = 4, 8, 16, 16  # in_planes = planes = 8, stride = 1; W*C = 128

  ks = jax.random.split(key, 9)
  x = jax.random.normal(ks[0], (N, C, H, W), jnp.float32)
  w1 = jax.random.normal(ks[1], (C, C, 3, 3), jnp.float32) * 0.1
  w2 = jax.random.normal(ks[2], (C, C, 3, 3), jnp.float32) * 0.1
  bn1 = {
      "gamma": 1.0 + 0.1 * jax.random.normal(ks[3], (C,), jnp.float32),
      "beta": 0.1 * jax.random.normal(ks[4], (C,), jnp.float32),
      "mean": 0.05 * jax.random.normal(ks[5], (C,), jnp.float32),
      "var": jnp.abs(jax.random.normal(ks[6], (C,), jnp.float32)) + 0.5,
  }
  bn2 = {
      "gamma": 1.0 + 0.1 * jax.random.normal(ks[7], (C,), jnp.float32),
      "beta": 0.1 * jax.random.normal(ks[8], (C,), jnp.float32),
      "mean": jnp.zeros((C,), jnp.float32),
      "var": jnp.ones((C,), jnp.float32),
  }

  out = jax.block_until_ready(basic_block_res(x, w1, bn1, w2, bn2))
  ref = jax.block_until_ready(_reference(x, w1, bn1, w2, bn2))

  assert out.shape == (N, C, H, W), out.shape
  err = float(jnp.max(jnp.abs(out - ref)))
  # bf16 MXU operands (f32 accumulate) -> looser tolerance than a pure-f32 path.
  if err > 5e-2:
    raise AssertionError(f"mismatch vs reference, max abs err = {err}")
  print("KERNEL_OK")
</pallas_src>

<mosaic_0001>
module attributes {stable_mosaic.version = 11 : i64} {
  func.func @_block_kernel(%arg0: i32, %arg1: memref<2x16x128xf32, #tpu.memory_space<vmem>>, %arg2: memref<3x128x128xbf16, #tpu.memory_space<vmem>>, %arg3: memref<1x128xf32, #tpu.memory_space<vmem>>, %arg4: memref<3x128x128xbf16, #tpu.memory_space<vmem>>, %arg5: memref<1x128xf32, #tpu.memory_space<vmem>>, %arg6: memref<2x16x128xf32, #tpu.memory_space<vmem>>) attributes {dimension_semantics = [#tpu.dimension_semantics<parallel>], iteration_bounds = array<i64: 2>, scalar_prefetch = 0 : i64, scratch_operands = 0 : i64, tpu.core_type = #tpu.core_type<tc>, window_params = [{transform_indices = @transform_0, window_bounds = array<i64: 2, 16, 128>}, {pipeline_mode = #tpu.pipeline_mode<synchronous>, transform_indices = @transform_1, window_bounds = array<i64: 3, 128, 128>}, {pipeline_mode = #tpu.pipeline_mode<synchronous>, transform_indices = @transform_2, window_bounds = array<i64: 1, 128>}, {pipeline_mode = #tpu.pipeline_mode<synchronous>, transform_indices = @transform_3, window_bounds = array<i64: 3, 128, 128>}, {pipeline_mode = #tpu.pipeline_mode<synchronous>, transform_indices = @transform_4, window_bounds = array<i64: 1, 128>}, {transform_indices = @transform_5, window_bounds = array<i64: 2, 16, 128>}]} {
    %c0 = arith.constant 0 : index
    %c0_0 = arith.constant 0 : index
    %c0_1 = arith.constant 0 : index
    %0 = vector.load %arg1[%c0, %c0_0, %c0_1] : memref<2x16x128xf32, #tpu.memory_space<vmem>>, vector<2x16x128xf32>
    %1 = vector.shape_cast %0 : vector<2x16x128xf32> to vector<32x128xf32>
    %2 = arith.truncf %1 : vector<32x128xf32> to vector<32x128xbf16>
    %c0_2 = arith.constant 0 : index
    %c0_3 = arith.constant 0 : index
    %c0_4 = arith.constant 0 : index
    %3 = vector.load %arg2[%c0_2, %c0_3, %c0_4] : memref<3x128x128xbf16, #tpu.memory_space<vmem>>, vector<1x128x128xbf16>
    %4 = vector.shape_cast %3 : vector<1x128x128xbf16> to vector<128x128xbf16>
    %cst = arith.constant dense<0.000000e+00> : vector<32x128xf32>
    %5 = tpu.matmul %2, %4, %cst {dimension_numbers = #tpu.dot_dimension_numbers<[1], [0], [0], [1], [0, 0, 1, 1], [], []>} : vector<32x128xbf16>, vector<128x128xbf16>, vector<32x128xf32> -> vector<32x128xf32>
    %c1 = arith.constant 1 : index
    %c0_5 = arith.constant 0 : index
    %c0_6 = arith.constant 0 : index
    %6 = vector.load %arg2[%c1, %c0_5, %c0_6] : memref<3x128x128xbf16, #tpu.memory_space<vmem>>, vector<1x128x128xbf16>
    %7 = vector.shape_cast %6 : vector<1x128x128xbf16> to vector<128x128xbf16>
    %cst_7 = arith.constant dense<0.000000e+00> : vector<32x128xf32>
    %8 = tpu.matmul %2, %7, %cst_7 {dimension_numbers = #tpu.dot_dimension_numbers<[1], [0], [0], [1], [0, 0, 1, 1], [], []>} : vector<32x128xbf16>, vector<128x128xbf16>, vector<32x128xf32> -> vector<32x128xf32>
    %c2 = arith.constant 2 : index
    %c0_8 = arith.constant 0 : index
    %c0_9 = arith.constant 0 : index
    %9 = vector.load %arg2[%c2, %c0_8, %c0_9] : memref<3x128x128xbf16, #tpu.memory_space<vmem>>, vector<1x128x128xbf16>
    %10 = vector.shape_cast %9 : vector<1x128x128xbf16> to vector<128x128xbf16>
    %cst_10 = arith.constant dense<0.000000e+00> : vector<32x128xf32>
    %11 = tpu.matmul %2, %10, %cst_10 {dimension_numbers = #tpu.dot_dimension_numbers<[1], [0], [0], [1], [0, 0, 1, 1], [], []>} : vector<32x128xbf16>, vector<128x128xbf16>, vector<32x128xf32> -> vector<32x128xf32>
    %12 = vector.shape_cast %5 : vector<32x128xf32> to vector<2x16x128xf32>
    %13 = vector.shape_cast %8 : vector<32x128xf32> to vector<2x16x128xf32>
    %14 = vector.shape_cast %11 : vector<32x128xf32> to vector<2x16x128xf32>
    %cst_11 = arith.constant 0.000000e+00 : f32
    %15 = vector.broadcast %cst_11 : f32 to vector<2x1x128xf32>
    %16 = vector.extract_strided_slice %12 {offsets = [0, 0, 0], sizes = [2, 15, 128], strides = [1, 1, 1]} : vector<2x16x128xf32> to vector<2x15x128xf32>
    %17 = tpu.concatenate %15, %16 in 1 : vector<2x1x128xf32>, vector<2x15x128xf32> -> vector<2x16x128xf32>
    %18 = arith.addf %17, %13 : vector<2x16x128xf32>
    %19 = vector.extract_strided_slice %14 {offsets = [0, 1, 0], sizes = [2, 15, 128], strides = [1, 1, 1]} : vector<2x16x128xf32> to vector<2x15x128xf32>
    %20 = tpu.concatenate %19, %15 in 1 : vector<2x15x128xf32>, vector<2x1x128xf32> -> vector<2x16x128xf32>
    %21 = arith.addf %18, %20 : vector<2x16x128xf32>
    %c0_12 = arith.constant 0 : index
    %c0_13 = arith.constant 0 : index
    %22 = vector.load %arg3[%c0_12, %c0_13] : memref<1x128xf32, #tpu.memory_space<vmem>>, vector<1x128xf32>
    %23 = vector.shape_cast %22 : vector<1x128xf32> to vector<1x1x128xf32>
    %24 = vector.broadcast %23 : vector<1x1x128xf32> to vector<2x16x128xf32>
    %25 = arith.addf %21, %24 : vector<2x16x128xf32>
    %cst_14 = arith.constant 0.000000e+00 : f32
    %26 = vector.broadcast %cst_14 : f32 to vector<2x16x128xf32>
    %27 = arith.maximumf %25, %26 : vector<2x16x128xf32>
    %28 = vector.shape_cast %27 : vector<2x16x128xf32> to vector<32x128xf32>
    %29 = arith.truncf %28 : vector<32x128xf32> to vector<32x128xbf16>
    %c0_15 = arith.constant 0 : index
    %c0_16 = arith.constant 0 : index
    %c0_17 = arith.constant 0 : index
    %30 = vector.load %arg4[%c0_15, %c0_16, %c0_17] : memref<3x128x128xbf16, #tpu.memory_space<vmem>>, vector<1x128x128xbf16>
    %31 = vector.shape_cast %30 : vector<1x128x128xbf16> to vector<128x128xbf16>
    %cst_18 = arith.constant dense<0.000000e+00> : vector<32x128xf32>
    %32 = tpu.matmul %29, %31, %cst_18 {dimension_numbers = #tpu.dot_dimension_numbers<[1], [0], [0], [1], [0, 0, 1, 1], [], []>} : vector<32x128xbf16>, vector<128x128xbf16>, vector<32x128xf32> -> vector<32x128xf32>
    %c1_19 = arith.constant 1 : index
    %c0_20 = arith.constant 0 : index
    %c0_21 = arith.constant 0 : index
    %33 = vector.load %arg4[%c1_19, %c0_20, %c0_21] : memref<3x128x128xbf16, #tpu.memory_space<vmem>>, vector<1x128x128xbf16>
    %34 = vector.shape_cast %33 : vector<1x128x128xbf16> to vector<128x128xbf16>
    %cst_22 = arith.constant dense<0.000000e+00> : vector<32x128xf32>
    %35 = tpu.matmul %29, %34, %cst_22 {dimension_numbers = #tpu.dot_dimension_numbers<[1], [0], [0], [1], [0, 0, 1, 1], [], []>} : vector<32x128xbf16>, vector<128x128xbf16>, vector<32x128xf32> -> vector<32x128xf32>
    %c2_23 = arith.constant 2 : index
    %c0_24 = arith.constant 0 : index
    %c0_25 = arith.constant 0 : index
    %36 = vector.load %arg4[%c2_23, %c0_24, %c0_25] : memref<3x128x128xbf16, #tpu.memory_space<vmem>>, vector<1x128x128xbf16>
    %37 = vector.shape_cast %36 : vector<1x128x128xbf16> to vector<128x128xbf16>
    %cst_26 = arith.constant dense<0.000000e+00> : vector<32x128xf32>
    %38 = tpu.matmul %29, %37, %cst_26 {dimension_numbers = #tpu.dot_dimension_numbers<[1], [0], [0], [1], [0, 0, 1, 1], [], []>} : vector<32x128xbf16>, vector<128x128xbf16>, vector<32x128xf32> -> vector<32x128xf32>
    %39 = vector.shape_cast %32 : vector<32x128xf32> to vector<2x16x128xf32>
    %40 = vector.shape_cast %35 : vector<32x128xf32> to vector<2x16x128xf32>
    %41 = vector.shape_cast %38 : vector<32x128xf32> to vector<2x16x128xf32>
    %cst_27 = arith.constant 0.000000e+00 : f32
    %42 = vector.broadcast %cst_27 : f32 to vector<2x1x128xf32>
    %43 = vector.extract_strided_slice %39 {offsets = [0, 0, 0], sizes = [2, 15, 128], strides = [1, 1, 1]} : vector<2x16x128xf32> to vector<2x15x128xf32>
    %44 = tpu.concatenate %42, %43 in 1 : vector<2x1x128xf32>, vector<2x15x128xf32> -> vector<2x16x128xf32>
    %45 = arith.addf %44, %40 : vector<2x16x128xf32>
    %46 = vector.extract_strided_slice %41 {offsets = [0, 1, 0], sizes = [2, 15, 128], strides = [1, 1, 1]} : vector<2x16x128xf32> to vector<2x15x128xf32>
    %47 = tpu.concatenate %46, %42 in 1 : vector<2x15x128xf32>, vector<2x1x128xf32> -> vector<2x16x128xf32>
    %48 = arith.addf %45, %47 : vector<2x16x128xf32>
    %c0_28 = arith.constant 0 : index
    %c0_29 = arith.constant 0 : index
    %49 = vector.load %arg5[%c0_28, %c0_29] : memref<1x128xf32, #tpu.memory_space<vmem>>, vector<1x128xf32>
    %50 = vector.shape_cast %49 : vector<1x128xf32> to vector<1x1x128xf32>
    %51 = vector.broadcast %50 : vector<1x1x128xf32> to vector<2x16x128xf32>
    %52 = arith.addf %48, %51 : vector<2x16x128xf32>
    %c0_30 = arith.constant 0 : index
    %c0_31 = arith.constant 0 : index
    %c0_32 = arith.constant 0 : index
    %53 = vector.load %arg1[%c0_30, %c0_31, %c0_32] : memref<2x16x128xf32, #tpu.memory_space<vmem>>, vector<2x16x128xf32>
    %54 = arith.addf %52, %53 : vector<2x16x128xf32>
    %cst_33 = arith.constant 0.000000e+00 : f32
    %55 = vector.broadcast %cst_33 : f32 to vector<2x16x128xf32>
    %56 = arith.maximumf %54, %55 : vector<2x16x128xf32>
    %c0_34 = arith.constant 0 : index
    %c0_35 = arith.constant 0 : index
    %c0_36 = arith.constant 0 : index
    %57 = vector.load %arg6[%c0_34, %c0_35, %c0_36] : memref<2x16x128xf32, #tpu.memory_space<vmem>>, vector<2x16x128xf32>
    tpu.vector_store %arg6[%c0_34, %c0_35, %c0_36], %56 {strides = array<i32>} : memref<2x16x128xf32, #tpu.memory_space<vmem>>, vector<2x16x128xf32>,
    return
  }
  func.func @transform_0(%arg0: i32) -> (i32, i32, i32) {
    %c0_i32 = arith.constant 0 : i32
    %c0_i32_0 = arith.constant 0 : i32
    %c0_i32_1 = arith.constant 0 : i32
    return %arg0, %c0_i32, %c0_i32_0 : i32, i32, i32
  }
  func.func @transform_1(%arg0: i32) -> (i32, i32, i32) {
    %c0_i32 = arith.constant 0 : i32
    %c0_i32_0 = arith.constant 0 : i32
    %c0_i32_1 = arith.constant 0 : i32
    %c0_i32_2 = arith.constant 0 : i32
    return %c0_i32, %c0_i32_0, %c0_i32_1 : i32, i32, i32
  }
  func.func @transform_2(%arg0: i32) -> (i32, i32) {
    %c0_i32 = arith.constant 0 : i32
    %c0_i32_0 = arith.constant 0 : i32
    %c0_i32_1 = arith.constant 0 : i32
    return %c0_i32, %c0_i32_0 : i32, i32
  }
  func.func @transform_3(%arg0: i32) -> (i32, i32, i32) {
    %c0_i32 = arith.constant 0 : i32
    %c0_i32_0 = arith.constant 0 : i32
    %c0_i32_1 = arith.constant 0 : i32
    %c0_i32_2 = arith.constant 0 : i32
    return %c0_i32, %c0_i32_0, %c0_i32_1 : i32, i32, i32
  }
  func.func @transform_4(%arg0: i32) -> (i32, i32) {
    %c0_i32 = arith.constant 0 : i32
    %c0_i32_0 = arith.constant 0 : i32
    %c0_i32_1 = arith.constant 0 : i32
    return %c0_i32, %c0_i32_0 : i32, i32
  }
  func.func @transform_5(%arg0: i32) -> (i32, i32, i32) {
    %c0_i32 = arith.constant 0 : i32
    %c0_i32_0 = arith.constant 0 : i32
    %c0_i32_1 = arith.constant 0 : i32
    return %arg0, %c0_i32, %c0_i32_0 : i32, i32, i32
  }
}

</mosaic_0001>

<llo_original>
// kernel: tpu_custom_call.1
$region0: #{tpu_custom_call.1}
  #allocation0 [shape = 'u32[]', space=smem, size = 0x4, offset = 0x4, fixed_abs, tag = 'smem constant byte address 0x4 - core index']
  #allocation1 [shape = 'u32[72,128]{1,0:T(1,128)}', space=vmem, size = 0x9000, scoped, tag = 'internal scratch']
  %s0 = inlined_call_operand.hbm [shape: f32[4,16,128], index: 0, kind: input, shape index: {}]
  %s1 = inlined_call_operand.hbm [shape: bf16[3,128,128], index: 1, kind: input, shape index: {}]
  %s2 = inlined_call_operand.vmem [shape: f32[1,128], index: 2, kind: input, shape index: {}]
  %s3 = inlined_call_operand.hbm [shape: bf16[3,128,128], index: 3, kind: input, shape index: {}]
  %s4 = inlined_call_operand.vmem [shape: f32[1,128], index: 4, kind: input, shape index: {}]
  %s5 = inlined_call_operand.hbm [shape: f32[4,16,128], index: 5, kind: output, shape index: {}]
  %s6 = sld [smem:[#allocation0]]
  $region65: #{tpu_custom_call.1} parent=0
    _
  %s8 = ssub.s32 1, %s6
  %s9 = scalar_select 0, %s8, %s6
  $region1: #{tpu_custom_call.1} parent=0
    #allocation2 [shape = 'u8[32768]{0}', space=vmem, size = 0x8000, scoped, tag = 'input window, operand 0']
    #allocation3 [shape = 's32[2]{0}', space=sflag, size = 0x8, scoped, tag = 'scoped memory for tpu_custom_call.1']
    #allocation4 [shape = 's32[2]{0}', space=sflag, size = 0x8, scoped, tag = 'scoped memory for tpu_custom_call.1']
    #allocation5 [shape = 'u8[98304]{0}', space=vmem, size = 0x18000, scoped, tag = 'input window, operand 1, single buffered']
    #allocation6 [shape = 's32[1]{0}', space=sflag, size = 0x4, scoped, tag = 'scoped memory for tpu_custom_call.1']
    #allocation7 [shape = 'u8[98304]{0}', space=vmem, size = 0x18000, scoped, tag = 'input window, operand 3, single buffered']
    #allocation8 [shape = 'u8[32768]{0}', space=vmem, size = 0x8000, scoped, tag = 'output window, operand 0']
    %10 = vsyncpa [#allocation3], 0
    %s11 = scalar_lea.sflag [#allocation3], 1
    %12 = vsyncpa %s11, 0
    %13 = vsyncpa [#allocation6], 0
    %14 = vsyncpa [#allocation4], 0
    %s15 = scalar_lea.sflag [#allocation4], 1
    %16 = vsyncpa %s15, 0
    loop: start=0, step=1, limit=4
    $region2: #{tpu_custom_call.1} parent=1 // loop_pre_header
      _
    $region3: #{tpu_custom_call.1} parent=1 // loop_header
      %s18 = sphi 0, %s22
      %p19 = scmp.ge.s32.totalorder %s18, 4
      %s28 = sphi 0, %s30
      %s31 = sphi 0, %s28
      %s32 = sphi 0, %s31
      %s48 = sphi 0, %s32
      %s52 = sphi 0, %s52
      %s54 = sphi 0, %s52
      %s55 = sphi 0, %s54
      %s69 = sphi 0, %s55
      %s73 = sphi 0, %s73
      %s75 = sphi 0, %s73
      %s76 = sphi 0, %s75
      %s90 = sphi 0, %s76
      %s94 = sphi 0, %s94
      %s96 = sphi 0, %s94
      %s97 = sphi 0, %s96
      %s111 = sphi 0, %s97
      %s115 = sphi 0, %s115
      %s117 = sphi 0, %s115
      %s118 = sphi 0, %s117
      %s132 = sphi 0, %s118
      %s138 = sphi 0, %s140
      %s141 = sphi 0, %s138
      %s142 = sphi 0, %s141
      %s158 = sphi 0, %s142
    $region4: #{tpu_custom_call.1} parent=1 // loop_header_branch
      %21 = sbr.rel (%p19) target = $region8
    $region5: #{tpu_custom_call.1} parent=1 // loop_body
      %s23 = ssub.s32 %s18, 1
      %s24 = ssub.s32 %s18, 2
      %s25 = sadd.s32 %s18, 1
      %s26 = ssub.s32 %s18, %s25
      %p27 = scmp.eq.s32.totalorder %s26, 0
      %s29 = sadd.s32 %s28, 1
      %s30 = scalar_select %p27, %s28, %s29
      %p33 = pneg %p27
      %p34 = scmp.eq.s32.totalorder %s18, 1
      %p35 = por %p33, %p34
      %p36 = scmp.ne.s32.totalorder %s28, %s31
      %p37 = scmp.eq.s32.totalorder %s18, 0
      %p38 = por %p36, %p37
      %p39 = scmp.ne.s32.totalorder %s28, %s31
      %p40 = scmp.eq.s32.totalorder %s23, 1
      %p41 = por %p39, %p40
      %p42 = scmp.ne.s32.totalorder %s31, %s32
      %p43 = scmp.eq.s32.totalorder %s23, 0
      %p44 = por %p42, %p43
      %p45 = scmp.ne.s32.totalorder %s31, %s32
      %p46 = scmp.eq.s32.totalorder %s24, 1
      %p47 = por %p45, %p46
      %p49 = scmp.ne.s32.totalorder %s32, %s48
      %p50 = scmp.eq.s32.totalorder %s24, 0
      %p51 = por %p49, %p50
      %s53 = sadd.s32 %s52, 1
      %p56 = scmp.eq.s32.totalorder %s18, 1
      %p57 = scmp.ne.s32.totalorder %s52, %s54
      %p58 = scmp.eq.s32.totalorder %s18, 0
      %p59 = por %p57, %p58
      %p60 = scmp.ne.s32.totalorder %s52, %s54
      %p61 = scmp.eq.s32.totalorder %s23, 1
      %p62 = por %p60, %p61
      %p63 = scmp.ne.s32.totalorder %s54, %s55
      %p64 = scmp.eq.s32.totalorder %s23, 0
      %p65 = por %p63, %p64
      %p66 = scmp.ne.s32.totalorder %s54, %s55
      %p67 = scmp.eq.s32.totalorder %s24, 1
      %p68 = por %p66, %p67
      %p70 = scmp.ne.s32.totalorder %s55, %s69
      %p71 = scmp.eq.s32.totalorder %s24, 0
      %p72 = por %p70, %p71
      %s74 = sadd.s32 %s73, 1
      %p77 = scmp.eq.s32.totalorder %s18, 1
      %p78 = scmp.ne.s32.totalorder %s73, %s75
      %p79 = scmp.eq.s32.totalorder %s18, 0
      %p80 = por %p78, %p79
      %p81 = scmp.ne.s32.totalorder %s73, %s75
      %p82 = scmp.eq.s32.totalorder %s23, 1
      %p83 = por %p81, %p82
      %p84 = scmp.ne.s32.totalorder %s75, %s76
      %p85 = scmp.eq.s32.totalorder %s23, 0
      %p86 = por %p84, %p85
      %p87 = scmp.ne.s32.totalorder %s75, %s76
      %p88 = scmp.eq.s32.totalorder %s24, 1
      %p89 = por %p87, %p88
      %p91 = scmp.ne.s32.totalorder %s76, %s90
      %p92 = scmp.eq.s32.totalorder %s24, 0
      %p93 = por %p91, %p92
      %s95 = sadd.s32 %s94, 1
      %p98 = scmp.eq.s32.totalorder %s18, 1
      %p99 = scmp.ne.s32.totalorder %s94, %s96
      %p100 = scmp.eq.s32.totalorder %s18, 0
      %p101 = por %p99, %p100
      %p102 = scmp.ne.s32.totalorder %s94, %s96
      %p103 = scmp.eq.s32.totalorder %s23, 1
      %p104 = por %p102, %p103
      %p105 = scmp.ne.s32.totalorder %s96, %s97
      %p106 = scmp.eq.s32.totalorder %s23, 0
      %p107 = por %p105, %p106
      %p108 = scmp.ne.s32.totalorder %s96, %s97
      %p109 = scmp.eq.s32.totalorder %s24, 1
      %p110 = por %p108, %p109
      %p112 = scmp.ne.s32.totalorder %s97, %s111
      %p113 = scmp.eq.s32.totalorder %s24, 0
      %p114 = por %p112, %p113
      %s116 = sadd.s32 %s115, 1
      %p119 = scmp.eq.s32.totalorder %s18, 1
      %p120 = scmp.ne.s32.totalorder %s115, %s117
      %p121 = scmp.eq.s32.totalorder %s18, 0
      %p122 = por %p120, %p121
      %p123 = scmp.ne.s32.totalorder %s115, %s117
      %p124 = scmp.eq.s32.totalorder %s23, 1
      %p125 = por %p123, %p124
      %p126 = scmp.ne.s32.totalorder %s117, %s118
      %p127 = scmp.eq.s32.totalorder %s23, 0
      %p128 = por %p126, %p127
      %p129 = scmp.ne.s32.totalorder %s117, %s118
      %p130 = scmp.eq.s32.totalorder %s24, 1
      %p131 = por %p129, %p130
      %p133 = scmp.ne.s32.totalorder %s118, %s132
      %p134 = scmp.eq.s32.totalorder %s24, 0
      %p135 = por %p133, %p134
      %s136 = ssub.s32 %s18, %s25
      %p137 = scmp.eq.s32.totalorder %s136, 0
      %s139 = sadd.s32 %s138, 1
      %s140 = scalar_select %p137, %s138, %s139
      %p143 = pneg %p137
      %p144 = scmp.eq.s32.totalorder %s18, 1
      %p145 = por %p143, %p144
      %p146 = scmp.ne.s32.totalorder %s138, %s141
      %p147 = scmp.eq.s32.totalorder %s18, 0
      %p148 = por %p146, %p147
      %p149 = scmp.ne.s32.totalorder %s138, %s141
      %p150 = scmp.eq.s32.totalorder %s23, 1
      %p151 = por %p149, %p150
      %p152 = scmp.ne.s32.totalorder %s141, %s142
      %p153 = scmp.eq.s32.totalorder %s23, 0
      %p154 = por %p152, %p153
      %p155 = scmp.ne.s32.totalorder %s141, %s142
      %p156 = scmp.eq.s32.totalorder %s24, 1
      %p157 = por %p155, %p156
      %p159 = scmp.ne.s32.totalorder %s142, %s158
      %p160 = scmp.eq.s32.totalorder %s24, 0
      %p161 = por %p159, %p160
      %p162 = scmp.le.s32.totalorder 1, %s18
      %p163 = scmp.lt.s32.totalorder %s18, 3
      %p164 = pnand %p162, %p163
      %p165 = pneg %p164
      // Predicated region
      $region9: #{tpu_custom_call.1} parent=5 // pred_check
        _
      $region10: #{tpu_custom_call.1} parent=5 // pred_check_branch
        %167 = sbr.rel (%p164) target = $region12
      $region11: #{tpu_custom_call.1} parent=5 // pred_region
        %s168 = ssub.s32 %s18, 1
        // Predicated region
        $region13: #{tpu_custom_call.1} parent=11 // pred_check
          %p169 = pneg %p65
        $region14: #{tpu_custom_call.1} parent=11 // pred_check_branch
          %171 = sbr.rel (%p169) target = $region16
        $region15: #{tpu_custom_call.1} parent=11 // pred_region
          %173 = vsyncadd [#allocation6], 0
          %s174 = sshll.u32 %s1, 4
          %s175 = int_to_ptr.hbm [resolvable:$true] %s174
          %s176 = sshll.u32 [#allocation5], 4
          %s177 = int_to_ptr.vmem [resolvable:$true] %s176
          %182 = dma.hbm_to_vmem [thread:$0]  %s175, 3072, %s177, [#allocation6], 64, 64, 4
        $region16: #{tpu_custom_call.1} parent=11 // pred_fallthru
          _
        // Predicated region
        $region17: #{tpu_custom_call.1} parent=11 // pred_check
          %p183 = pneg %p86
        $region18: #{tpu_custom_call.1} parent=11 // pred_check_branch
          %185 = sbr.rel (%p183) target = $region20
        $region19: #{tpu_custom_call.1} parent=11 // pred_region
          _
        $region20: #{tpu_custom_call.1} parent=11 // pred_fallthru
          _
        // Predicated region
        $region21: #{tpu_custom_call.1} parent=11 // pred_check
          %p186 = pneg %p107
        $region22: #{tpu_custom_call.1} parent=11 // pred_check_branch
          %188 = sbr.rel (%p186) target = $region24
        $region23: #{tpu_custom_call.1} parent=11 // pred_region
          %190 = vsyncadd [#allocation6], 0
          %s191 = sshll.u32 %s3, 4
          %s192 = int_to_ptr.hbm [resolvable:$true] %s191
          %s193 = sshll.u32 [#allocation7], 4
          %s194 = int_to_ptr.vmem [resolvable:$true] %s193
          %199 = dma.hbm_to_vmem [thread:$0]  %s192, 3072, %s194, [#allocation6], 64, 64, 4
        $region24: #{tpu_custom_call.1} parent=11 // pred_fallthru
          _
        // Predicated region
        $region25: #{tpu_custom_call.1} parent=11 // pred_check
          %p200 = pneg %p128
        $region26: #{tpu_custom_call.1} parent=11 // pred_check_branch
          %202 = sbr.rel (%p200) target = $region28
        $region27: #{tpu_custom_call.1} parent=11 // pred_region
          _
        $region28: #{tpu_custom_call.1} parent=11 // pred_fallthru
          _
      $region12: #{tpu_custom_call.1} parent=5 // pred_fallthru
        _
      %p203 = scmp.lt.s32.totalorder %s18, 2
      // Predicated region
      $region29: #{tpu_custom_call.1} parent=5 // pred_check
        %p204 = pneg %p203
      $region30: #{tpu_custom_call.1} parent=5 // pred_check_branch
        %206 = sbr.rel (%p204) target = $region32
      $region31: #{tpu_custom_call.1} parent=5 // pred_region
        // Predicated region
        $region33: #{tpu_custom_call.1} parent=31 // pred_check
          %p207 = pneg %p38
        $region34: #{tpu_custom_call.1} parent=31 // pred_check_branch
          %209 = sbr.rel (%p207) target = $region36
        $region35: #{tpu_custom_call.1} parent=31 // pred_region
          %s210 = sand.u32 %s28, 1
          %s211 = scalar_lea.sflag [#allocation3], %s210
          %s212 = sand.u32 %s28, 1
          %s213 = smul.addr %s212, 32
          %s214 = scalar_lea.vmem [#allocation2], %s213
          %s215 = smul.u32 2, %s18
          %217 = vsyncadd %s211, 0
          %s218 = smul.addr %s215, 2
          %s219 = smul.addr %s218, 8
          %s220 = scalar_lea.hbm %s0, %s219
          %s221 = sshll.u32 %s220, 4
          %s222 = int_to_ptr.hbm [resolvable:$true] %s221
          %s223 = sshll.u32 %s214, 4
          %s224 = int_to_ptr.vmem [resolvable:$true] %s223
          %229 = dma.hbm_to_vmem [thread:$0]  %s222, 512, %s224, %s211, 128, 128, 8
        $region36: #{tpu_custom_call.1} parent=31 // pred_fallthru
          _
      $region32: #{tpu_custom_call.1} parent=5 // pred_fallthru
        _
      %p230 = scmp.le.s32.totalorder 1, %s18
      %p231 = scmp.lt.s32.totalorder %s18, 3
      %p232 = pnand %p230, %p231
      %p233 = pneg %p232
      // Predicated region
      $region37: #{tpu_custom_call.1} parent=5 // pred_check
        _
      $region38: #{tpu_custom_call.1} parent=5 // pred_check_branch
        %235 = sbr.rel (%p232) target = $region40
      $region39: #{tpu_custom_call.1} parent=5 // pred_region
        %s236 = ssub.s32 %s18, 1
        %s237 = sand.u32 %s31, 1
        %s238 = scalar_lea.sflag [#allocation3], %s237
        %s239 = sand.u32 %s31, 1
        %s240 = smul.addr %s239, 32
        %s241 = scalar_lea.vmem [#allocation2], %s240
        // Predicated region
        $region41: #{tpu_custom_call.1} parent=39 // pred_check
          %p242 = pneg %p44
        $region42: #{tpu_custom_call.1} parent=39 // pred_check_branch
          %244 = sbr.rel (%p242) target = $region44
        $region43: #{tpu_custom_call.1} parent=39 // pred_region
          %246 = dma.done %s238, 512
        $region44: #{tpu_custom_call.1} parent=39 // pred_fallthru
          _
        // Predicated region
        $region45: #{tpu_custom_call.1} parent=39 // pred_check
          %p247 = pneg %p65
        $region46: #{tpu_custom_call.1} parent=39 // pred_check_branch
          %249 = sbr.rel (%p247) target = $region48
        $region47: #{tpu_custom_call.1} parent=39 // pred_region
          %251 = dma.done [#allocation6], 3072
        $region48: #{tpu_custom_call.1} parent=39 // pred_fallthru
          _
        // Predicated region
        $region49: #{tpu_custom_call.1} parent=39 // pred_check
          %p252 = pneg %p107
        $region50: #{tpu_custom_call.1} parent=39 // pred_check_branch
          %254 = sbr.rel (%p252) target = $region52
        $region51: #{tpu_custom_call.1} parent=39 // pred_region
          %256 = dma.done [#allocation6], 3072
        $region52: #{tpu_custom_call.1} parent=39 // pred_fallthru
          _
        %s257 = sand.u32 %s31, 1
        %s258 = scalar_lea.sflag [#allocation3], %s257
        %s259 = sand.u32 %s31, 1
        %s260 = smul.addr %s259, 32
        %s261 = scalar_lea.vmem [#allocation2], %s260
        %p262 = pneg %p44
        %p263 = pneg %p41
        %p264 = pneg %p65
        %p265 = pneg %p62
        %p266 = pneg %p86
        %p267 = pneg %p83
        %p268 = pneg %p107
        %p269 = pneg %p104
        %p270 = pneg %p128
        %p271 = pneg %p125
        %p272 = pneg %p154
        %p273 = pneg %p151
        %s274 = sand.u32 %s141, 1
        %s275 = scalar_lea.sflag [#allocation4], %s274
        %s276 = sand.u32 %s141, 1
        %s277 = smul.addr %s276, 32
        %s278 = scalar_lea.vmem [#allocation8], %s277
        %s279 = smul.u32 2, %s23
        %s280 = smul.u32 2, %s23
        %v281 = vld [vmem:[%s241] sm:$0xff]
        %v282 = vld [vmem:[%s241 + $0x8] sm:$0xff]
        %v283 = vld [vmem:[%s241 + $0x10] sm:$0xff]
        %v284 = vld [vmem:[%s241 + $0x18] sm:$0xff]
        %v285 = vpack.c.bf16 %v282, %v281
        %v286 = vpack.c.bf16 %v284, %v283
        %v287 = vld [vmem:[#allocation5] sm:$0xf]
        %v288 = vld [vmem:[#allocation5 + $0x4] sm:$0xf]
        %v289 = vld [vmem:[#allocation5 + $0x8] sm:$0xf]
        %v290 = vld [vmem:[#allocation5 + $0xc] sm:$0xf]
        %v291 = vld [vmem:[#allocation5 + $0x10] sm:$0xf]
        %v292 = vld [vmem:[#allocation5 + $0x14] sm:$0xf]
        %v293 = vld [vmem:[#allocation5 + $0x18] sm:$0xf]
        %v294 = vld [vmem:[#allocation5 + $0x1c] sm:$0xf]
        %v295 = vld [vmem:[#allocation5 + $0x20] sm:$0xf]
        %v296 = vld [vmem:[#allocation5 + $0x24] sm:$0xf]
        %v297 = vld [vmem:[#allocation5 + $0x28] sm:$0xf]
        %v298 = vld [vmem:[#allocation5 + $0x2c] sm:$0xf]
        %v299 = vld [vmem:[#allocation5 + $0x30] sm:$0xf]
        %v300 = vld [vmem:[#allocation5 + $0x34] sm:$0xf]
        %v301 = vld [vmem:[#allocation5 + $0x38] sm:$0xf]
        %v302 = vld [vmem:[#allocation5 + $0x3c] sm:$0xf]
        %v319 = vunpack.c.l.b16 %v287
        %v320 = vunpack.c.l.b16 %v288
        %v321 = vunpack.c.l.b16 %v289
        %v322 = vunpack.c.l.b16 %v290
        %v323 = vunpack.c.l.b16 %v291
        %v324 = vunpack.c.l.b16 %v292
        %v325 = vunpack.c.l.b16 %v293
        %v326 = vunpack.c.l.b16 %v294
        %v327 = vunpack.c.l.b16 %v295
        %v328 = vunpack.c.l.b16 %v296
        %v329 = vunpack.c.l.b16 %v297
        %v330 = vunpack.c.l.b16 %v298
        %v331 = vunpack.c.l.b16 %v299
        %v332 = vunpack.c.l.b16 %v300
        %v333 = vunpack.c.l.b16 %v301
        %v334 = vunpack.c.l.b16 %v302
        %v335 = vpack.c.b16 %v320, %v319
        %v336 = vpack.c.b16 %v322, %v321
        %v337 = vpack.c.b16 %v324, %v323
        %v338 = vpack.c.b16 %v326, %v325
        %v339 = vpack.c.b16 %v328, %v327
        %v340 = vpack.c.b16 %v330, %v329
        %v341 = vpack.c.b16 %v332, %v331
        %v342 = vpack.c.b16 %v334, %v333
        %351 = vmatpush.bf16.msra.mxu0 %v342
        %352 = vmatpush.bf16.msra.mxu0 %v341
        %353 = vmatpush.bf16.msra.mxu0 %v340
        %354 = vmatpush.bf16.msra.mxu0 %v339
        %355 = vmatpush.bf16.msra.mxu0 %v338
        %356 = vmatpush.bf16.msra.mxu0 %v337
        %357 = vmatpush.bf16.msra.mxu0 %v336
        %358 = vmatpush.bf16.msra.mxu0 %v335
        %359 = vmatmul.bf16.gmra.mxu0 %v285
        %v360 = vpop.f32.mrf.mxu0
        %v361 = vadd.f32 0.0, %v360
        %v362 = vpop.f32.mrf.mxu0
        %v363 = vadd.f32 0.0, %v362
        %364 = vmatmul.bf16.gmra.mxu0 %v286
        %v365 = vpop.f32.mrf.mxu0
        %v366 = vadd.f32 0.0, %v365
        %v367 = vpop.f32.mrf.mxu0
        %v368 = vadd.f32 0.0, %v367
        %369 = vdwg.mxu0
        %s370 = scalar_lea.vmem [#allocation5], 64
        %v371 = vld [vmem:[%s370] sm:$0xf]
        %v372 = vld [vmem:[%s370 + $0x4] sm:$0xf]
        %v373 = vld [vmem:[%s370 + $0x8] sm:$0xf]
        %v374 = vld [vmem:[%s370 + $0xc] sm:$0xf]
        %v375 = vld [vmem:[%s370 + $0x10] sm:$0xf]
        %v376 = vld [vmem:[%s370 + $0x14] sm:$0xf]
        %v377 = vld [vmem:[%s370 + $0x18] sm:$0xf]
        %v378 = vld [vmem:[%s370 + $0x1c] sm:$0xf]
        %v379 = vld [vmem:[%s370 + $0x20] sm:$0xf]
        %v380 = vld [vmem:[%s370 + $0x24] sm:$0xf]
        %v381 = vld [vmem:[%s370 + $0x28] sm:$0xf]
        %v382 = vld [vmem:[%s370 + $0x2c] sm:$0xf]
        %v383 = vld [vmem:[%s370 + $0x30] sm:$0xf]
        %v384 = vld [vmem:[%s370 + $0x34] sm:$0xf]
        %v385 = vld [vmem:[%s370 + $0x38] sm:$0xf]
        %v386 = vld [vmem:[%s370 + $0x3c] sm:$0xf]
        %v403 = vunpack.c.l.b16 %v371
        %v404 = vunpack.c.l.b16 %v372
        %v405 = vunpack.c.l.b16 %v373
        %v406 = vunpack.c.l.b16 %v374
        %v407 = vunpack.c.l.b16 %v375
        %v408 = vunpack.c.l.b16 %v376
        %v409 = vunpack.c.l.b16 %v377
        %v410 = vunpack.c.l.b16 %v378
        %v411 = vunpack.c.l.b16 %v379
        %v412 = vunpack.c.l.b16 %v380
        %v413 = vunpack.c.l.b16 %v381
        %v414 = vunpack.c.l.b16 %v382
        %v415 = vunpack.c.l.b16 %v383
        %v416 = vunpack.c.l.b16 %v384
        %v417 = vunpack.c.l.b16 %v385
        %v418 = vunpack.c.l.b16 %v386
        %v419 = vpack.c.b16 %v404, %v403
        %v420 = vpack.c.b16 %v406, %v405
        %v421 = vpack.c.b16 %v408, %v407
        %v422 = vpack.c.b16 %v410, %v409
        %v423 = vpack.c.b16 %v412, %v411
        %v424 = vpack.c.b16 %v414, %v413
        %v425 = vpack.c.b16 %v416, %v415
        %v426 = vpack.c.b16 %v418, %v417
        %435 = vmatpush.bf16.msra.mxu0 %v426
        %436 = vmatpush.bf16.msra.mxu0 %v425
        %437 = vmatpush.bf16.msra.mxu0 %v424
        %438 = vmatpush.bf16.msra.mxu0 %v423
        %439 = vmatpush.bf16.msra.mxu0 %v422
        %440 = vmatpush.bf16.msra.mxu0 %v421
        %441 = vmatpush.bf16.msra.mxu0 %v420
        %442 = vmatpush.bf16.msra.mxu0 %v419
        %443 = vmatmul.bf16.gmra.mxu0 %v285
        %v444 = vpop.f32.mrf.mxu0
        %v445 = vadd.f32 0.0, %v444
        %v446 = vpop.f32.mrf.mxu0
        %v447 = vadd.f32 0.0, %v446
        %448 = vmatmul.bf16.gmra.mxu0 %v286
        %v449 = vpop.f32.mrf.mxu0
        %v450 = vadd.f32 0.0, %v449
        %v451 = vpop.f32.mrf.mxu0
        %v452 = vadd.f32 0.0, %v451
        %453 = vdwg.mxu0
        %s454 = scalar_lea.vmem [#allocation5], 128
        %v455 = vld [vmem:[%s454] sm:$0xf]
        %v456 = vld [vmem:[%s454 + $0x4] sm:$0xf]
        %v457 = vld [vmem:[%s454 + $0x8] sm:$0xf]
        %v458 = vld [vmem:[%s454 + $0xc] sm:$0xf]
        %v459 = vld [vmem:[%s454 + $0x10] sm:$0xf]
        %v460 = vld [vmem:[%s454 + $0x14] sm:$0xf]
        %v461 = vld [vmem:[%s454 + $0x18] sm:$0xf]
        %v462 = vld [vmem:[%s454 + $0x1c] sm:$0xf]
        %v463 = vld [vmem:[%s454 + $0x20] sm:$0xf]
        %v464 = vld [vmem:[%s454 + $0x24] sm:$0xf]
        %v465 = vld [vmem:[%s454 + $0x28] sm:$0xf]
        %v466 = vld [vmem:[%s454 + $0x2c] sm:$0xf]
        %v467 = vld [vmem:[%s454 + $0x30] sm:$0xf]
        %v468 = vld [vmem:[%s454 + $0x34] sm:$0xf]
        %v469 = vld [vmem:[%s454 + $0x38] sm:$0xf]
        %v470 = vld [vmem:[%s454 + $0x3c] sm:$0xf]
        %v487 = vunpack.c.l.b16 %v455
        %v488 = vunpack.c.l.b16 %v456
        %v489 = vunpack.c.l.b16 %v457
        %v490 = vunpack.c.l.b16 %v458
        %v491 = vunpack.c.l.b16 %v459
        %v492 = vunpack.c.l.b16 %v460
        %v493 = vunpack.c.l.b16 %v461
        %v494 = vunpack.c.l.b16 %v462
        %v495 = vunpack.c.l.b16 %v463
        %v496 = vunpack.c.l.b16 %v464
        %v497 = vunpack.c.l.b16 %v465
        %v498 = vunpack.c.l.b16 %v466
        %v499 = vunpack.c.l.b16 %v467
        %v500 = vunpack.c.l.b16 %v468
        %v501 = vunpack.c.l.b16 %v469
        %v502 = vunpack.c.l.b16 %v470
        %v503 = vpack.c.b16 %v488, %v487
        %v504 = vpack.c.b16 %v490, %v489
        %v505 = vpack.c.b16 %v492, %v491
        %v506 = vpack.c.b16 %v494, %v493
        %v507 = vpack.c.b16 %v496, %v495
        %v508 = vpack.c.b16 %v498, %v497
        %v509 = vpack.c.b16 %v500, %v499
        %v510 = vpack.c.b16 %v502, %v501
        %519 = vmatpush.bf16.msra.mxu0 %v510
        %520 = vmatpush.bf16.msra.mxu0 %v509
        %521 = vmatpush.bf16.msra.mxu0 %v508
        %522 = vmatpush.bf16.msra.mxu0 %v507
        %523 = vmatpush.bf16.msra.mxu0 %v506
        %524 = vmatpush.bf16.msra.mxu0 %v505
        %525 = vmatpush.bf16.msra.mxu0 %v504
        %526 = vmatpush.bf16.msra.mxu0 %v503
        %527 = vmatmul.bf16.gmra.mxu0 %v285
        %v528 = vpop.f32.mrf.mxu0
        %v529 = vadd.f32 0.0, %v528
        %v530 = vpop.f32.mrf.mxu0
        %v531 = vadd.f32 0.0, %v530
        %532 = vmatmul.bf16.gmra.mxu0 %v286
        %v533 = vpop.f32.mrf.mxu0
        %v534 = vadd.f32 0.0, %v533
        %v535 = vpop.f32.mrf.mxu0
        %v536 = vadd.f32 0.0, %v535
        %537 = vdwg.mxu0
        %vm542 = vcmask 1040384
        %v543 = vrot.slane %v361, 7
        %v544 = vrot.slane %v363, 7
        %v545 = vsel %vm542, %v543, %v544
        %v546 = vrot.slane %v366, 7
        %v547 = vrot.slane %v368, 7
        %v548 = vsel %vm542, %v546, %v547
        %v553 = vsel %vm542, 0.0, %v543
        %v554 = vsel %vm542, 0.0, %v546
        %v555 = vadd.f32 %v553, %v445
        %v556 = vadd.f32 %v545, %v447
        %v557 = vadd.f32 %v554, %v450
        %v558 = vadd.f32 %v548, %v452
        %vm563 = vcmask 1046528
        %v564 = vrot.slane %v529, 1
        %v565 = vrot.slane %v531, 1
        %v566 = vsel %vm563, %v564, %v565
        %v567 = vrot.slane %v534, 1
        %v568 = vrot.slane %v536, 1
        %v569 = vsel %vm563, %v567, %v568
        %v574 = vsel %vm563, %v565, 0.0
        %v575 = vsel %vm563, %v568, 0.0
        %v576 = vadd.f32 %v555, %v566
        %v577 = vadd.f32 %v556, %v574
        %v578 = vadd.f32 %v557, %v569
        %v579 = vadd.f32 %v558, %v575
        %v580 = vld [vmem:[%s2] sm:$0x1]
        %v582 = vperm.slane %v580, 0
        %v584 = vadd.f32 %v576, %v582
        %v585 = vadd.f32 %v577, %v582
        %v586 = vadd.f32 %v578, %v582
        %v587 = vadd.f32 %v579, %v582
        %v588 = vmax.f32 %v584, 0.0
        %v589 = vmax.f32 %v585, 0.0
        %v590 = vmax.f32 %v586, 0.0
        %v591 = vmax.f32 %v587, 0.0
        %v592 = vpack.c.bf16 %v589, %v588
        %v593 = vpack.c.bf16 %v591, %v590
        %v594 = vld [vmem:[#allocation7] sm:$0xf]
        %v595 = vld [vmem:[#allocation7 + $0x4] sm:$0xf]
        %v596 = vld [vmem:[#allocation7 + $0x8] sm:$0xf]
        %v597 = vld [vmem:[#allocation7 + $0xc] sm:$0xf]
        %v598 = vld [vmem:[#allocation7 + $0x10] sm:$0xf]
        %v599 = vld [vmem:[#allocation7 + $0x14] sm:$0xf]
        %v600 = vld [vmem:[#allocation7 + $0x18] sm:$0xf]
        %v601 = vld [vmem:[#allocation7 + $0x1c] sm:$0xf]
        %v602 = vld [vmem:[#allocation7 + $0x20] sm:$0xf]
        %v603 = vld [vmem:[#allocation7 + $0x24] sm:$0xf]
        %v604 = vld [vmem:[#allocation7 + $0x28] sm:$0xf]
        %v605 = vld [vmem:[#allocation7 + $0x2c] sm:$0xf]
        %v606 = vld [vmem:[#allocation7 + $0x30] sm:$0xf]
        %v607 = vld [vmem:[#allocation7 + $0x34] sm:$0xf]
        %v608 = vld [vmem:[#allocation7 + $0x38] sm:$0xf]
        %v609 = vld [vmem:[#allocation7 + $0x3c] sm:$0xf]
        %v626 = vunpack.c.l.b16 %v594
        %v627 = vunpack.c.l.b16 %v595
        %v628 = vunpack.c.l.b16 %v596
        %v629 = vunpack.c.l.b16 %v597
        %v630 = vunpack.c.l.b16 %v598
        %v631 = vunpack.c.l.b16 %v599
        %v632 = vunpack.c.l.b16 %v600
        %v633 = vunpack.c.l.b16 %v601
        %v634 = vunpack.c.l.b16 %v602
        %v635 = vunpack.c.l.b16 %v603
        %v636 = vunpack.c.l.b16 %v604
        %v637 = vunpack.c.l.b16 %v605
        %v638 = vunpack.c.l.b16 %v606
        %v639 = vunpack.c.l.b16 %v607
        %v640 = vunpack.c.l.b16 %v608
        %v641 = vunpack.c.l.b16 %v609
        %v642 = vpack.c.b16 %v627, %v626
        %v643 = vpack.c.b16 %v629, %v628
        %v644 = vpack.c.b16 %v631, %v630
        %v645 = vpack.c.b16 %v633, %v632
        %v646 = vpack.c.b16 %v635, %v634
        %v647 = vpack.c.b16 %v637, %v636
        %v648 = vpack.c.b16 %v639, %v638
        %v649 = vpack.c.b16 %v641, %v640
        %658 = vmatpush.bf16.msra.mxu0 %v649
        %659 = vmatpush.bf16.msra.mxu0 %v648
        %660 = vmatpush.bf16.msra.mxu0 %v647
        %661 = vmatpush.bf16.msra.mxu0 %v646
        %662 = vmatpush.bf16.msra.mxu0 %v645
        %663 = vmatpush.bf16.msra.mxu0 %v644
        %664 = vmatpush.bf16.msra.mxu0 %v643
        %665 = vmatpush.bf16.msra.mxu0 %v642
        %666 = vmatmul.bf16.gmra.mxu0 %v592
        %v667 = vpop.f32.mrf.mxu0
        %v668 = vadd.f32 0.0, %v667
        %v669 = vpop.f32.mrf.mxu0
        %v670 = vadd.f32 0.0, %v669
        %671 = vmatmul.bf16.gmra.mxu0 %v593
        %v672 = vpop.f32.mrf.mxu0
        %v673 = vadd.f32 0.0, %v672
        %v674 = vpop.f32.mrf.mxu0
        %v675 = vadd.f32 0.0, %v674
        %676 = vdwg.mxu0
        %s677 = scalar_lea.vmem [#allocation7], 64
        %v678 = vld [vmem:[%s677] sm:$0xf]
        %v679 = vld [vmem:[%s677 + $0x4] sm:$0xf]
        %v680 = vld [vmem:[%s677 + $0x8] sm:$0xf]
        %v681 = vld [vmem:[%s677 + $0xc] sm:$0xf]
        %v682 = vld [vmem:[%s677 + $0x10] sm:$0xf]
        %v683 = vld [vmem:[%s677 + $0x14] sm:$0xf]
        %v684 = vld [vmem:[%s677 + $0x18] sm:$0xf]
        %v685 = vld [vmem:[%s677 + $0x1c] sm:$0xf]
        %v686 = vld [vmem:[%s677 + $0x20] sm:$0xf]
        %v687 = vld [vmem:[%s677 + $0x24] sm:$0xf]
        %v688 = vld [vmem:[%s677 + $0x28] sm:$0xf]
        %v689 = vld [vmem:[%s677 + $0x2c] sm:$0xf]
        %v690 = vld [vmem:[%s677 + $0x30] sm:$0xf]
        %v691 = vld [vmem:[%s677 + $0x34] sm:$0xf]
        %v692 = vld [vmem:[%s677 + $0x38] sm:$0xf]
        %v693 = vld [vmem:[%s677 + $0x3c] sm:$0xf]
        %v710 = vunpack.c.l.b16 %v678
        %v711 = vunpack.c.l.b16 %v679
        %v712 = vunpack.c.l.b16 %v680
        %v713 = vunpack.c.l.b16 %v681
        %v714 = vunpack.c.l.b16 %v682
        %v715 = vunpack.c.l.b16 %v683
        %v716 = vunpack.c.l.b16 %v684
        %v717 = vunpack.c.l.b16 %v685
        %v718 = vunpack.c.l.b16 %v686
        %v719 = vunpack.c.l.b16 %v687
        %v720 = vunpack.c.l.b16 %v688
        %v721 = vunpack.c.l.b16 %v689
        %v722 = vunpack.c.l.b16 %v690
        %v723 = vunpack.c.l.b16 %v691
        %v724 = vunpack.c.l.b16 %v692
        %v725 = vunpack.c.l.b16 %v693
        %v726 = vpack.c.b16 %v711, %v710
        %v727 = vpack.c.b16 %v713, %v712
        %v728 = vpack.c.b16 %v715, %v714
        %v729 = vpack.c.b16 %v717, %v716
        %v730 = vpack.c.b16 %v719, %v718
        %v731 = vpack.c.b16 %v721, %v720
        %v732 = vpack.c.b16 %v723, %v722
        %v733 = vpack.c.b16 %v725, %v724
        %742 = vmatpush.bf16.msra.mxu0 %v733
        %743 = vmatpush.bf16.msra.mxu0 %v732
        %744 = vmatpush.bf16.msra.mxu0 %v731
        %745 = vmatpush.bf16.msra.mxu0 %v730
        %746 = vmatpush.bf16.msra.mxu0 %v729
        %747 = vmatpush.bf16.msra.mxu0 %v728
        %748 = vmatpush.bf16.msra.mxu0 %v727
        %749 = vmatpush.bf16.msra.mxu0 %v726
        %750 = vmatmul.bf16.gmra.mxu0 %v592
        %v751 = vpop.f32.mrf.mxu0
        %v752 = vadd.f32 0.0, %v751
        %v753 = vpop.f32.mrf.mxu0
        %v754 = vadd.f32 0.0, %v753
        %755 = vmatmul.bf16.gmra.mxu0 %v593
        %v756 = vpop.f32.mrf.mxu0
        %v757 = vadd.f32 0.0, %v756
        %v758 = vpop.f32.mrf.mxu0
        %v759 = vadd.f32 0.0, %v758
        %760 = vdwg.mxu0
        %s761 = scalar_lea.vmem [#allocation7], 128
        %v762 = vld [vmem:[%s761] sm:$0xf]
        %v763 = vld [vmem:[%s761 + $0x4] sm:$0xf]
        %v764 = vld [vmem:[%s761 + $0x8] sm:$0xf]
        %v765 = vld [vmem:[%s761 + $0xc] sm:$0xf]
        %v766 = vld [vmem:[%s761 + $0x10] sm:$0xf]
        %v767 = vld [vmem:[%s761 + $0x14] sm:$0xf]
        %v768 = vld [vmem:[%s761 + $0x18] sm:$0xf]
        %v769 = vld [vmem:[%s761 + $0x1c] sm:$0xf]
        %v770 = vld [vmem:[%s761 + $0x20] sm:$0xf]
        %v771 = vld [vmem:[%s761 + $0x24] sm:$0xf]
        %v772 = vld [vmem:[%s761 + $0x28] sm:$0xf]
        %v773 = vld [vmem:[%s761 + $0x2c] sm:$0xf]
        %v774 = vld [vmem:[%s761 + $0x30] sm:$0xf]
        %v775 = vld [vmem:[%s761 + $0x34] sm:$0xf]
        %v776 = vld [vmem:[%s761 + $0x38] sm:$0xf]
        %v777 = vld [vmem:[%s761 + $0x3c] sm:$0xf]
        %v794 = vunpack.c.l.b16 %v762
        %v795 = vunpack.c.l.b16 %v763
        %v796 = vunpack.c.l.b16 %v764
        %v797 = vunpack.c.l.b16 %v765
        %v798 = vunpack.c.l.b16 %v766
        %v799 = vunpack.c.l.b16 %v767
        %v800 = vunpack.c.l.b16 %v768
        %v801 = vunpack.c.l.b16 %v769
        %v802 = vunpack.c.l.b16 %v770
        %v803 = vunpack.c.l.b16 %v771
        %v804 = vunpack.c.l.b16 %v772
        %v805 = vunpack.c.l.b16 %v773
        %v806 = vunpack.c.l.b16 %v774
        %v807 = vunpack.c.l.b16 %v775
        %v808 = vunpack.c.l.b16 %v776
        %v809 = vunpack.c.l.b16 %v777
        %v810 = vpack.c.b16 %v795, %v794
        %v811 = vpack.c.b16 %v797, %v796
        %v812 = vpack.c.b16 %v799, %v798
        %v813 = vpack.c.b16 %v801, %v800
        %v814 = vpack.c.b16 %v803, %v802
        %v815 = vpack.c.b16 %v805, %v804
        %v816 = vpack.c.b16 %v807, %v806
        %v817 = vpack.c.b16 %v809, %v808
        %826 = vmatpush.bf16.msra.mxu0 %v817
        %827 = vmatpush.bf16.msra.mxu0 %v816
        %828 = vmatpush.bf16.msra.mxu0 %v815
        %829 = vmatpush.bf16.msra.mxu0 %v814
        %830 = vmatpush.bf16.msra.mxu0 %v813
        %831 = vmatpush.bf16.msra.mxu0 %v812
        %832 = vmatpush.bf16.msra.mxu0 %v811
        %833 = vmatpush.bf16.msra.mxu0 %v810
        %834 = vmatmul.bf16.gmra.mxu0 %v592
        %v835 = vpop.f32.mrf.mxu0
        %v836 = vadd.f32 0.0, %v835
        %v837 = vpop.f32.mrf.mxu0
        %v838 = vadd.f32 0.0, %v837
        %839 = vmatmul.bf16.gmra.mxu0 %v593
        %v840 = vpop.f32.mrf.mxu0
        %v841 = vadd.f32 0.0, %v840
        %v842 = vpop.f32.mrf.mxu0
        %v843 = vadd.f32 0.0, %v842
        %844 = vdwg.mxu0
        %v849 = vrot.slane %v668, 7
        %v850 = vrot.slane %v670, 7
        %v851 = vsel %vm542, %v849, %v850
        %v852 = vrot.slane %v673, 7
        %v853 = vrot.slane %v675, 7
        %v854 = vsel %vm542, %v852, %v853
        %v859 = vsel %vm542, 0.0, %v849
        %v860 = vsel %vm542, 0.0, %v852
        %v861 = vadd.f32 %v859, %v752
        %v862 = vadd.f32 %v851, %v754
        %v863 = vadd.f32 %v860, %v757
        %v864 = vadd.f32 %v854, %v759
        %v869 = vrot.slane %v836, 1
        %v870 = vrot.slane %v838, 1
        %v871 = vsel %vm563, %v869, %v870
        %v872 = vrot.slane %v841, 1
        %v873 = vrot.slane %v843, 1
        %v874 = vsel %vm563, %v872, %v873
        %v879 = vsel %vm563, %v870, 0.0
        %v880 = vsel %vm563, %v873, 0.0
        %v881 = vadd.f32 %v861, %v871
        %v882 = vadd.f32 %v862, %v879
        %v883 = vadd.f32 %v863, %v874
        %v884 = vadd.f32 %v864, %v880
        %v885 = vld [vmem:[%s4] sm:$0x1]
        %v887 = vperm.slane %v885, 0
        %v889 = vadd.f32 %v881, %v887
        %v890 = vadd.f32 %v882, %v887
        %v891 = vadd.f32 %v883, %v887
        %v892 = vadd.f32 %v884, %v887
        %v893 = vadd.f32 %v889, %v281
        %v894 = vadd.f32 %v890, %v282
        %v895 = vadd.f32 %v891, %v283
        %v896 = vadd.f32 %v892, %v284
        %v897 = vmax.f32 %v893, 0.0
        %v898 = vmax.f32 %v894, 0.0
        %v899 = vmax.f32 %v895, 0.0
        %v900 = vmax.f32 %v896, 0.0
        %901 = vst [vmem:[%s278] sm:$0xff] %v897
        %902 = vst [vmem:[%s278 + $0x8] sm:$0xff] %v898
        %903 = vst [vmem:[%s278 + $0x10] sm:$0xff] %v899
        %904 = vst [vmem:[%s278 + $0x18] sm:$0xff] %v900
        %s905 = sand.u32 %s141, 1
        %s906 = scalar_lea.sflag [#allocation4], %s905
        %s907 = sand.u32 %s141, 1
        %s908 = smul.addr %s907, 32
        %s909 = scalar_lea.vmem [#allocation8], %s908
        // Predicated region
        $region53: #{tpu_custom_call.1} parent=39 // pred_check
          %p910 = pneg %p151
        $region54: #{tpu_custom_call.1} parent=39 // pred_check_branch
          %912 = sbr.rel (%p910) target = $region56
        $region55: #{tpu_custom_call.1} parent=39 // pred_region
          %s913 = smul.u32 2, %s23
          %915 = vsyncadd %s906, 0
          %s916 = smul.addr %s913, 2
          %s917 = smul.addr %s916, 8
          %s918 = scalar_lea.hbm %s5, %s917
          %s919 = sshll.u32 %s909, 4
          %s920 = int_to_ptr.vmem [resolvable:$true] %s919
          %s921 = sshll.u32 %s918, 4
          %s922 = int_to_ptr.hbm [resolvable:$true] %s921
          %927 = dma.vmem_to_hbm [thread:$0]  %s920, 512, %s922, %s906, 128, 128, 8
        $region56: #{tpu_custom_call.1} parent=39 // pred_fallthru
          _
      $region40: #{tpu_custom_call.1} parent=5 // pred_fallthru
        _
      %p928 = scmp.le.s32.totalorder 2, %s18
      // Predicated region
      $region57: #{tpu_custom_call.1} parent=5 // pred_check
        %p929 = pneg %p928
      $region58: #{tpu_custom_call.1} parent=5 // pred_check_branch
        %931 = sbr.rel (%p929) target = $region60
      $region59: #{tpu_custom_call.1} parent=5 // pred_region
        %s932 = ssub.s32 %s18, 2
        // Predicated region
        $region61: #{tpu_custom_call.1} parent=59 // pred_check
          %p933 = pneg %p157
        $region62: #{tpu_custom_call.1} parent=59 // pred_check_branch
          %935 = sbr.rel (%p933) target = $region64
        $region63: #{tpu_custom_call.1} parent=59 // pred_region
          %s936 = sand.u32 %s142, 1
          %s937 = scalar_lea.sflag [#allocation4], %s936
          %s938 = sand.u32 %s142, 1
          %s939 = smul.addr %s938, 32
          %s940 = scalar_lea.vmem [#allocation8], %s939
          %942 = dma.done %s937, 512
        $region64: #{tpu_custom_call.1} parent=59 // pred_fallthru
          _
      $region60: #{tpu_custom_call.1} parent=5 // pred_fallthru
        _
    $region6: #{tpu_custom_call.1} parent=1 // loop_footer
      %s22 = sadd.s32 1, %s18
    $region7: #{tpu_custom_call.1} parent=1 // loop_footer_branch
      %17 = sbr.rel target = $region3
    $region8: #{tpu_custom_call.1} parent=1 // loop_exit
      _
    %943 = vsyncpa [#allocation3], 1
    %s944 = scalar_lea.sflag [#allocation3], 1
    %945 = vsyncpa %s944, 1
    %946 = vsyncpa [#allocation6], 1
    %947 = vsyncpa [#allocation4], 1
    %s948 = scalar_lea.sflag [#allocation4], 1
    %949 = vsyncpa %s948, 1

</llo_original>
